<compile_context>
chip_gen: v7x
topology: tpu7x:2x2x1
jax: 0.10.0
libtpu: 0.0.40
codegen_flags: <defaults>
</compile_context>

<pallas_src>
import functools

import jax
import jax.numpy as jnp
from jax import lax
from jax.experimental import pallas as pl
from jax.experimental.pallas import tpu as pltpu

MARGIN = 1.0            # parity with the nn.Module __init__ (unused in forward)
TEMP = 0.05
INV_TEMP = 1.0 / TEMP
COS_EPS = 1e-8          # torch.cosine_similarity default eps


def _triplet_loss_kernel(a_ref, p_ref, n_ref, out_ref, *, batch, tile_b):
    a = a_ref[...].astype(jnp.float32)            # (TB, D)
    p = p_ref[...].astype(jnp.float32)
    n = n_ref[...].astype(jnp.float32)

    # Row-wise dot products / squared norms (lane reduction over D, XLU path).
    ap_dot = jnp.sum(a * p, axis=-1, keepdims=True)   # (TB, 1)
    an_dot = jnp.sum(a * n, axis=-1, keepdims=True)
    a_sq = jnp.sum(a * a, axis=-1, keepdims=True)
    p_sq = jnp.sum(p * p, axis=-1, keepdims=True)
    n_sq = jnp.sum(n * n, axis=-1, keepdims=True)

    # cos(x, y) = dot / max(||x|| * ||y||, eps)  -- sqrt per factor avoids the
    # f32 overflow of a_sq * p_sq for very large-norm embeddings.
    a_norm = jnp.sqrt(a_sq)
    cos_pos = ap_dot / jnp.maximum(a_norm * jnp.sqrt(p_sq), COS_EPS)
    cos_neg = an_dot / jnp.maximum(a_norm * jnp.sqrt(n_sq), COS_EPS)

    # -log(exp(p)/(exp(p)+exp(n))) == softplus(n - p); overflow-safe form.
    x = (cos_neg - cos_pos) * INV_TEMP
    row_loss = jnp.maximum(x, 0.0) + jnp.log1p(jnp.exp(-jnp.abs(x)))  # (TB, 1)

    # Mask padded rows of a ragged last tile (static check: compiled only when
    # needed). Select also stops NaN/Inf from garbage rows reaching the sum.
    if batch % tile_b != 0:
        rows = pl.program_id(0) * tile_b + lax.broadcasted_iota(
            jnp.int32, (tile_b, 1), 0)
        row_loss = jnp.where(rows < batch, row_loss, 0.0)

    # One scalar partial sum per tile, stored lane-dense as (1, 1, 128).
    partial = jnp.sum(row_loss)
    out_ref[...] = jnp.broadcast_to(partial, out_ref.shape).astype(jnp.float32)


def _choose_tile_b(batch, d, itemsize, n_buf):
    """Pick TB rows per tile: ~2 MiB streamed per input block, bounded by a
    VMEM budget that also counts the in-kernel f32 temporaries."""
    # Target block bytes: >=1 MiB blocks measure ~85% of HBM roofline vs ~60%
    # at 256 KiB, so aim for 2 MiB per input per step.
    target_block_bytes = 2 * 1024 * 1024
    tb = max(8, target_block_bytes // (d * itemsize))

    # Total VMEM estimate per TB rows:
    #   streamed inputs : 3 arrays * n_buf buffers * D * itemsize
    #   f32 temporaries : ~5 live (TB, D) f32 arrays (a/p/n promotions + products)
    # Budget 40 MiB -> always fits v7x's 64 MiB physical VMEM with headroom.
    budget = 40 * 1024 * 1024
    per_row = 3 * n_buf * d * itemsize + 5 * d * 4
    tb = min(tb, max(8, budget // per_row))

    tb = min(tb, batch)
    if tb < batch:
        tb = max(8, (tb // 8) * 8)   # keep partial tiles sublane-aligned
    return tb


def _vmem_limit_bytes(tile_b, d, itemsize, n_buf):
    usage = (3 * n_buf * tile_b * d * itemsize   # streamed input buffers
             + 5 * tile_b * d * 4                # in-kernel f32 temporaries
             + n_buf * 128 * 4)                  # output blocks (tiny)
    # Floor at the v5e default (16 MiB) so small problems keep compiler slack;
    # cap at 48 MiB so the plan always fits v7x's 64 MiB physical VMEM.
    return int(min(48 << 20, max(16 << 20, usage + (4 << 20))))


def _grid_semantics():
    """CORE_PARALLEL on v7x (2 TensorCores/chip) so both TCs split the tiles;
    plain 'parallel' elsewhere (single TC on v5e/v6e)."""
    try:
        kind = jax.devices()[0].device_kind.lower()
    except Exception:  # pragma: no cover - detection best-effort only
        kind = ""
    if "v7" in kind or "7x" in kind:
        return (pltpu.CORE_PARALLEL,)
    return ("parallel",)


def temperature_scaled_triplet_loss(anchor, positive, negative, *,
                                    tile_b=None, pipeline_buffers=2):
    """Forward pass of TemperatureScaledTripletLoss as a Pallas TPU kernel.

    Note for callers: this kernel is HBM-bandwidth-bound; keep embeddings
    stored in bf16 in HBM if possible (promotion to f32 happens in-kernel).
    """
    assert anchor.shape == positive.shape == negative.shape
    assert anchor.ndim == 2
    B, D = anchor.shape
    n_buf = max(2, int(pipeline_buffers))
    if tile_b is None:
        tile_b = _choose_tile_b(B, D, anchor.dtype.itemsize, n_buf)
    tile_b = min(tile_b, B)
    num_tiles = pl.cdiv(B, tile_b)

    kernel = functools.partial(_triplet_loss_kernel, batch=B, tile_b=tile_b)

    spec_kwargs = {}
    if n_buf != 2:
        # Optional deeper pipelining to hide writeback/prologue gaps on
        # fast-HBM chips; each extra buffer costs one tile of VMEM per input.
        spec_kwargs["pipeline_mode"] = pl.Buffered(n_buf)
    in_spec = pl.BlockSpec((tile_b, D), lambda i: (i, 0), **spec_kwargs)

    partials = pl.pallas_call(
        kernel,
        out_shape=jax.ShapeDtypeStruct((num_tiles, 1, 128), jnp.float32),
        grid_spec=pltpu.PrefetchScalarGridSpec(
            num_scalar_prefetch=0,
            grid=(num_tiles,),
            in_specs=[in_spec, in_spec, in_spec],
            out_specs=pl.BlockSpec((1, 1, 128), lambda i: (i, 0, 0)),
        ),
        compiler_params=pltpu.CompilerParams(
            dimension_semantics=_grid_semantics(),
            vmem_limit_bytes=_vmem_limit_bytes(
                tile_b, D, anchor.dtype.itemsize, n_buf)),
    )(anchor, positive, negative)

    # Each tile's scalar is replicated across 128 lanes, so sum-all / 128 is
    # exactly the sum of per-tile partials (power-of-two scaling is exact).
    return jnp.sum(partials) / (128.0 * B)


def _reference(anchor, positive, negative):
    # Pure-JAX reference mirroring the PyTorch forward exactly.
    def cos(x, y):
        dot = jnp.sum(x * y, axis=-1)
        nx = jnp.sqrt(jnp.sum(x * x, axis=-1))
        ny = jnp.sqrt(jnp.sum(y * y, axis=-1))
        return dot / jnp.maximum(nx * ny, COS_EPS)

    pos_sim = cos(anchor, positive) / TEMP
    neg_sim = cos(anchor, negative) / TEMP
    loss = -jnp.log(jnp.exp(pos_sim) / (jnp.exp(pos_sim) + jnp.exp(neg_sim)))
    return jnp.mean(loss)


if __name__ == "__main__":
    key = jax.random.PRNGKey(0)
    ka, kp, kn = jax.random.split(key, 3)
    # Small but lane-dense demo shapes: 40 triplets with 128-dim embeddings.
    B, D = 40, 128
    anchor = jax.random.normal(ka, (B, D), dtype=jnp.float32)
    positive = jax.random.normal(kp, (B, D), dtype=jnp.float32)
    negative = jax.random.normal(kn, (B, D), dtype=jnp.float32)

    # tile_b=16 -> 3 pipelined grid steps (last one ragged) to exercise the
    # tiled + masked path; production calls auto-pick ~2 MiB blocks.
    loss = temperature_scaled_triplet_loss(anchor, positive, negative, tile_b=16)
    jax.block_until_ready(loss)

    ref = _reference(anchor, positive, negative)
    assert jnp.allclose(loss, ref, rtol=1e-5, atol=1e-5), (loss, ref)

    # Auto-tiled path (single tile here) sanity check as well.
    loss_auto = temperature_scaled_triplet_loss(anchor, positive, negative)
    jax.block_until_ready(loss_auto)
    assert jnp.allclose(loss_auto, ref, rtol=1e-5, atol=1e-5), (loss_auto, ref)

    print("KERNEL_OK")
</pallas_src>

<mosaic_0001>
module attributes {stable_mosaic.version = 11 : i64} {
  func.func @_triplet_loss_kernel(%arg0: i32, %arg1: memref<16x128xf32, #tpu.memory_space<vmem>>, %arg2: memref<16x128xf32, #tpu.memory_space<vmem>>, %arg3: memref<16x128xf32, #tpu.memory_space<vmem>>, %arg4: memref<1x1x128xf32, #tpu.memory_space<vmem>>) attributes {dimension_semantics = [#tpu.dimension_semantics<parallel>], iteration_bounds = array<i64: 3>, scalar_prefetch = 0 : i64, scratch_operands = 0 : i64, tpu.core_type = #tpu.core_type<tc>, window_params = [{transform_indices = @transform_0, window_bounds = array<i64: 16, 128>}, {transform_indices = @transform_1, window_bounds = array<i64: 16, 128>}, {transform_indices = @transform_2, window_bounds = array<i64: 16, 128>}, {transform_indices = @transform_3, window_bounds = array<i64: 1, 1, 128>}]} {
    %c0 = arith.constant 0 : index
    %c0_0 = arith.constant 0 : index
    %0 = vector.load %arg1[%c0, %c0_0] : memref<16x128xf32, #tpu.memory_space<vmem>>, vector<16x128xf32>
    %c0_1 = arith.constant 0 : index
    %c0_2 = arith.constant 0 : index
    %1 = vector.load %arg2[%c0_1, %c0_2] : memref<16x128xf32, #tpu.memory_space<vmem>>, vector<16x128xf32>
    %c0_3 = arith.constant 0 : index
    %c0_4 = arith.constant 0 : index
    %2 = vector.load %arg3[%c0_3, %c0_4] : memref<16x128xf32, #tpu.memory_space<vmem>>, vector<16x128xf32>
    %3 = arith.mulf %0, %1 : vector<16x128xf32>
    %cst = arith.constant dense<0.000000e+00> : vector<16xf32>
    %4 = vector.multi_reduction <add>, %3, %cst [1] : vector<16x128xf32> to vector<16xf32>
    %5 = vector.shape_cast %4 : vector<16xf32> to vector<16x1xf32>
    %6 = arith.mulf %0, %2 : vector<16x128xf32>
    %cst_5 = arith.constant dense<0.000000e+00> : vector<16xf32>
    %7 = vector.multi_reduction <add>, %6, %cst_5 [1] : vector<16x128xf32> to vector<16xf32>
    %8 = vector.shape_cast %7 : vector<16xf32> to vector<16x1xf32>
    %9 = arith.mulf %0, %0 : vector<16x128xf32>
    %cst_6 = arith.constant dense<0.000000e+00> : vector<16xf32>
    %10 = vector.multi_reduction <add>, %9, %cst_6 [1] : vector<16x128xf32> to vector<16xf32>
    %11 = vector.shape_cast %10 : vector<16xf32> to vector<16x1xf32>
    %12 = arith.mulf %1, %1 : vector<16x128xf32>
    %cst_7 = arith.constant dense<0.000000e+00> : vector<16xf32>
    %13 = vector.multi_reduction <add>, %12, %cst_7 [1] : vector<16x128xf32> to vector<16xf32>
    %14 = vector.shape_cast %13 : vector<16xf32> to vector<16x1xf32>
    %15 = arith.mulf %2, %2 : vector<16x128xf32>
    %cst_8 = arith.constant dense<0.000000e+00> : vector<16xf32>
    %16 = vector.multi_reduction <add>, %15, %cst_8 [1] : vector<16x128xf32> to vector<16xf32>
    %17 = vector.shape_cast %16 : vector<16xf32> to vector<16x1xf32>
    %18 = math.sqrt %11 : vector<16x1xf32>
    %19 = math.sqrt %14 : vector<16x1xf32>
    %20 = arith.mulf %18, %19 : vector<16x1xf32>
    %cst_9 = arith.constant 9.99999993E-9 : f32
    %21 = vector.broadcast %cst_9 : f32 to vector<16x1xf32>
    %22 = arith.maximumf %20, %21 : vector<16x1xf32>
    %23 = arith.divf %5, %22 : vector<16x1xf32>
    %24 = math.sqrt %17 : vector<16x1xf32>
    %25 = arith.mulf %18, %24 : vector<16x1xf32>
    %cst_10 = arith.constant 9.99999993E-9 : f32
    %26 = vector.broadcast %cst_10 : f32 to vector<16x1xf32>
    %27 = arith.maximumf %25, %26 : vector<16x1xf32>
    %28 = arith.divf %8, %27 : vector<16x1xf32>
    %29 = arith.subf %28, %23 : vector<16x1xf32>
    %cst_11 = arith.constant 2.000000e+01 : f32
    %30 = vector.broadcast %cst_11 : f32 to vector<16x1xf32>
    %31 = arith.mulf %29, %30 : vector<16x1xf32>
    %cst_12 = arith.constant 0.000000e+00 : f32
    %32 = vector.broadcast %cst_12 : f32 to vector<16x1xf32>
    %33 = arith.maximumf %31, %32 : vector<16x1xf32>
    %34 = math.absf %31 : vector<16x1xf32>
    %cst_13 = arith.constant 0.000000e+00 : f32
    %35 = vector.broadcast %cst_13 : f32 to vector<16x1xf32>
    %36 = arith.subf %35, %34 : vector<16x1xf32>
    %37 = math.exp %36 : vector<16x1xf32>
    %38 = math.log1p %37 : vector<16x1xf32>
    %39 = arith.addf %33, %38 : vector<16x1xf32>
    %c16_i32 = arith.constant 16 : i32
    %40 = arith.muli %arg0, %c16_i32 : i32
    %41 = tpu.iota {dimensions = array<i32: 0>} : vector<16x1xi32>
    %42 = vector.broadcast %40 : i32 to vector<16x1xi32>
    %43 = arith.addi %42, %41 : vector<16x1xi32>
    %c40_i32 = arith.constant 40 : i32
    %44 = vector.broadcast %c40_i32 : i32 to vector<16x1xi32>
    %45 = arith.cmpi slt, %43, %44 : vector<16x1xi32>
    %cst_14 = arith.constant 0.000000e+00 : f32
    %46 = vector.broadcast %cst_14 : f32 to vector<16x1xf32>
    %47 = arith.select %45, %39, %46 : vector<16x1xi1>, vector<16x1xf32>
    %48 = vector.shape_cast %47 : vector<16x1xf32> to vector<1x16x1xf32>
    %cst_15 = arith.constant dense<0.000000e+00> : vector<1xf32>
    %49 = vector.multi_reduction <add>, %48, %cst_15 [1, 2] : vector<1x16x1xf32> to vector<1xf32>
    %50 = vector.shape_cast %49 : vector<1xf32> to vector<1x1x1xf32>
    %51 = vector.extract %50[0, 0, 0] : f32 from vector<1x1x1xf32>
    %52 = vector.broadcast %51 : f32 to vector<1x1x128xf32>
    %c0_16 = arith.constant 0 : index
    %c0_17 = arith.constant 0 : index
    %c0_18 = arith.constant 0 : index
    %53 = vector.load %arg4[%c0_16, %c0_17, %c0_18] : memref<1x1x128xf32, #tpu.memory_space<vmem>>, vector<1x1x128xf32>
    tpu.vector_store %arg4[%c0_16, %c0_17, %c0_18], %52 {strides = array<i32>} : memref<1x1x128xf32, #tpu.memory_space<vmem>>, vector<1x1x128xf32>,
    return
  }
  func.func @transform_0(%arg0: i32) -> (i32, i32) {
    %c0_i32 = arith.constant 0 : i32
    %c0_i32_0 = arith.constant 0 : i32
    return %arg0, %c0_i32 : i32, i32
  }
  func.func @transform_1(%arg0: i32) -> (i32, i32) {
    %c0_i32 = arith.constant 0 : i32
    %c0_i32_0 = arith.constant 0 : i32
    return %arg0, %c0_i32 : i32, i32
  }
  func.func @transform_2(%arg0: i32) -> (i32, i32) {
    %c0_i32 = arith.constant 0 : i32
    %c0_i32_0 = arith.constant 0 : i32
    return %arg0, %c0_i32 : i32, i32
  }
  func.func @transform_3(%arg0: i32) -> (i32, i32, i32) {
    %c0_i32 = arith.constant 0 : i32
    %c0_i32_0 = arith.constant 0 : i32
    %c0_i32_1 = arith.constant 0 : i32
    return %arg0, %c0_i32, %c0_i32_0 : i32, i32, i32
  }
}

</mosaic_0001>

<llo_original>
// kernel: tpu_custom_call.1
$region0: #{tpu_custom_call.1}
  #allocation0 [shape = 'u32[]', space=smem, size = 0x4, offset = 0x4, fixed_abs, tag = 'smem constant byte address 0x4 - core index']
  #allocation1 [shape = 'u32[144,128]{1,0:T(1,128)}', space=vmem, size = 0x12000, scoped, tag = 'internal scratch']
  %s0 = inlined_call_operand.hbm [shape: f32[40,128], index: 0, kind: input, shape index: {}]
  %s1 = inlined_call_operand.hbm [shape: f32[40,128], index: 1, kind: input, shape index: {}]
  %s2 = inlined_call_operand.hbm [shape: f32[40,128], index: 2, kind: input, shape index: {}]
  %s3 = inlined_call_operand.hbm [shape: f32[3,1,128], index: 3, kind: output, shape index: {}]
  %s4 = sld [smem:[#allocation0]]
  $region57: #{tpu_custom_call.1} parent=0
    _
  %s6 = ssub.s32 1, %s4
  %s7 = scalar_select 0, %s6, %s4
  $region1: #{tpu_custom_call.1} parent=0
    #allocation2 [shape = 'u8[16384]{0}', space=vmem, size = 0x4000, scoped, tag = 'input window, operand 0']
    #allocation3 [shape = 's32[2]{0}', space=sflag, size = 0x8, scoped, tag = 'scoped memory for tpu_custom_call.1']
    #allocation4 [shape = 's32[2]{0}', space=sflag, size = 0x8, scoped, tag = 'scoped memory for tpu_custom_call.1']
    #allocation5 [shape = 'u8[16384]{0}', space=vmem, size = 0x4000, scoped, tag = 'input window, operand 1']
    #allocation6 [shape = 's32[2]{0}', space=sflag, size = 0x8, scoped, tag = 'scoped memory for tpu_custom_call.1']
    #allocation7 [shape = 'u8[16384]{0}', space=vmem, size = 0x4000, scoped, tag = 'input window, operand 2']
    #allocation8 [shape = 'u8[1024]{0}', space=vmem, size = 0x400, scoped, tag = 'output window, operand 0']
    %8 = vsyncpa [#allocation3], 0
    %s9 = scalar_lea.sflag [#allocation3], 1
    %10 = vsyncpa %s9, 0
    %11 = vsyncpa [#allocation6], 0
    %s12 = scalar_lea.sflag [#allocation6], 1
    %13 = vsyncpa %s12, 0
    %14 = vsyncpa [#allocation4], 0
    %s15 = scalar_lea.sflag [#allocation4], 1
    %16 = vsyncpa %s15, 0
    loop: start=0, step=1, limit=5
    $region2: #{tpu_custom_call.1} parent=1 // loop_pre_header
      _
    $region3: #{tpu_custom_call.1} parent=1 // loop_header
      %s18 = sphi 0, %s22
      %p19 = scmp.ge.s32.totalorder %s18, 5
      %s28 = sphi 0, %s30
      %s31 = sphi 0, %s28
      %s32 = sphi 0, %s31
      %s48 = sphi 0, %s32
      %s54 = sphi 0, %s56
      %s57 = sphi 0, %s54
      %s58 = sphi 0, %s57
      %s74 = sphi 0, %s58
      %s80 = sphi 0, %s82
      %s83 = sphi 0, %s80
      %s84 = sphi 0, %s83
      %s100 = sphi 0, %s84
      %s106 = sphi 0, %s108
      %s109 = sphi 0, %s106
      %s110 = sphi 0, %s109
      %s126 = sphi 0, %s110
    $region4: #{tpu_custom_call.1} parent=1 // loop_header_branch
      %21 = sbr.rel (%p19) target = $region8
    $region5: #{tpu_custom_call.1} parent=1 // loop_body
      %s23 = ssub.s32 %s18, 1
      %s24 = ssub.s32 %s18, 2
      %s25 = sadd.s32 %s18, 1
      %s26 = ssub.s32 %s18, %s25
      %p27 = scmp.eq.s32.totalorder %s26, 0
      %s29 = sadd.s32 %s28, 1
      %s30 = scalar_select %p27, %s28, %s29
      %p33 = pneg %p27
      %p34 = scmp.eq.s32.totalorder %s18, 2
      %p35 = por %p33, %p34
      %p36 = scmp.ne.s32.totalorder %s28, %s31
      %p37 = scmp.eq.s32.totalorder %s18, 0
      %p38 = por %p36, %p37
      %p39 = scmp.ne.s32.totalorder %s28, %s31
      %p40 = scmp.eq.s32.totalorder %s23, 2
      %p41 = por %p39, %p40
      %p42 = scmp.ne.s32.totalorder %s31, %s32
      %p43 = scmp.eq.s32.totalorder %s23, 0
      %p44 = por %p42, %p43
      %p45 = scmp.ne.s32.totalorder %s31, %s32
      %p46 = scmp.eq.s32.totalorder %s24, 2
      %p47 = por %p45, %p46
      %p49 = scmp.ne.s32.totalorder %s32, %s48
      %p50 = scmp.eq.s32.totalorder %s24, 0
      %p51 = por %p49, %p50
      %s52 = ssub.s32 %s18, %s25
      %p53 = scmp.eq.s32.totalorder %s52, 0
      %s55 = sadd.s32 %s54, 1
      %s56 = scalar_select %p53, %s54, %s55
      %p59 = pneg %p53
      %p60 = scmp.eq.s32.totalorder %s18, 2
      %p61 = por %p59, %p60
      %p62 = scmp.ne.s32.totalorder %s54, %s57
      %p63 = scmp.eq.s32.totalorder %s18, 0
      %p64 = por %p62, %p63
      %p65 = scmp.ne.s32.totalorder %s54, %s57
      %p66 = scmp.eq.s32.totalorder %s23, 2
      %p67 = por %p65, %p66
      %p68 = scmp.ne.s32.totalorder %s57, %s58
      %p69 = scmp.eq.s32.totalorder %s23, 0
      %p70 = por %p68, %p69
      %p71 = scmp.ne.s32.totalorder %s57, %s58
      %p72 = scmp.eq.s32.totalorder %s24, 2
      %p73 = por %p71, %p72
      %p75 = scmp.ne.s32.totalorder %s58, %s74
      %p76 = scmp.eq.s32.totalorder %s24, 0
      %p77 = por %p75, %p76
      %s78 = ssub.s32 %s18, %s25
      %p79 = scmp.eq.s32.totalorder %s78, 0
      %s81 = sadd.s32 %s80, 1
      %s82 = scalar_select %p79, %s80, %s81
      %p85 = pneg %p79
      %p86 = scmp.eq.s32.totalorder %s18, 2
      %p87 = por %p85, %p86
      %p88 = scmp.ne.s32.totalorder %s80, %s83
      %p89 = scmp.eq.s32.totalorder %s18, 0
      %p90 = por %p88, %p89
      %p91 = scmp.ne.s32.totalorder %s80, %s83
      %p92 = scmp.eq.s32.totalorder %s23, 2
      %p93 = por %p91, %p92
      %p94 = scmp.ne.s32.totalorder %s83, %s84
      %p95 = scmp.eq.s32.totalorder %s23, 0
      %p96 = por %p94, %p95
      %p97 = scmp.ne.s32.totalorder %s83, %s84
      %p98 = scmp.eq.s32.totalorder %s24, 2
      %p99 = por %p97, %p98
      %p101 = scmp.ne.s32.totalorder %s84, %s100
      %p102 = scmp.eq.s32.totalorder %s24, 0
      %p103 = por %p101, %p102
      %s104 = ssub.s32 %s18, %s25
      %p105 = scmp.eq.s32.totalorder %s104, 0
      %s107 = sadd.s32 %s106, 1
      %s108 = scalar_select %p105, %s106, %s107
      %p111 = pneg %p105
      %p112 = scmp.eq.s32.totalorder %s18, 2
      %p113 = por %p111, %p112
      %p114 = scmp.ne.s32.totalorder %s106, %s109
      %p115 = scmp.eq.s32.totalorder %s18, 0
      %p116 = por %p114, %p115
      %p117 = scmp.ne.s32.totalorder %s106, %s109
      %p118 = scmp.eq.s32.totalorder %s23, 2
      %p119 = por %p117, %p118
      %p120 = scmp.ne.s32.totalorder %s109, %s110
      %p121 = scmp.eq.s32.totalorder %s23, 0
      %p122 = por %p120, %p121
      %p123 = scmp.ne.s32.totalorder %s109, %s110
      %p124 = scmp.eq.s32.totalorder %s24, 2
      %p125 = por %p123, %p124
      %p127 = scmp.ne.s32.totalorder %s110, %s126
      %p128 = scmp.eq.s32.totalorder %s24, 0
      %p129 = por %p127, %p128
      %p130 = scmp.le.s32.totalorder 1, %s18
      %p131 = scmp.lt.s32.totalorder %s18, 4
      %p132 = pnand %p130, %p131
      %p133 = pneg %p132
      // Predicated region
      $region9: #{tpu_custom_call.1} parent=5 // pred_check
        _
      $region10: #{tpu_custom_call.1} parent=5 // pred_check_branch
        %135 = sbr.rel (%p132) target = $region12
      $region11: #{tpu_custom_call.1} parent=5 // pred_region
        %s136 = ssub.s32 %s18, 1
      $region12: #{tpu_custom_call.1} parent=5 // pred_fallthru
        _
      %p137 = scmp.lt.s32.totalorder %s18, 3
      // Predicated region
      $region13: #{tpu_custom_call.1} parent=5 // pred_check
        %p138 = pneg %p137
      $region14: #{tpu_custom_call.1} parent=5 // pred_check_branch
        %140 = sbr.rel (%p138) target = $region16
      $region15: #{tpu_custom_call.1} parent=5 // pred_region
        // Predicated region
        $region17: #{tpu_custom_call.1} parent=15 // pred_check
          %p141 = pneg %p38
        $region18: #{tpu_custom_call.1} parent=15 // pred_check_branch
          %143 = sbr.rel (%p141) target = $region20
        $region19: #{tpu_custom_call.1} parent=15 // pred_region
          %s144 = sand.u32 %s28, 1
          %s145 = scalar_lea.sflag [#allocation3], %s144
          %s146 = sand.u32 %s28, 1
          %s147 = smul.addr %s146, 16
          %s148 = scalar_lea.vmem [#allocation2], %s147
          %s149 = smul.u32 2, %s18
          %s150 = ssub.s32 5, %s149
          %p151 = scmp.lt.s32.totalorder %s150, 2
          %s152 = scalar_select %p151, %s150, 2
          %s153 = smul.u32 128, %s152
          %s155 = ssub.s32 256, %s153
          %156 = vsyncadd %s145, %s155
          %p157 = scmp.ne.s32.totalorder 0, %s153
          %s158 = smul.addr %s149, 128
          %s159 = scalar_lea.hbm %s0, %s158
          %s160 = smul.u32 8, %s152
          %s161 = sshll.u32 %s148, 4
          %s162 = int_to_ptr.vmem [resolvable:$true] %s161
          %s163 = sshll.u32 %s160, 4
          %167 = dma.hbm_to_vmem [thread:$0]  (%p157), %s159, %s163, %s162, %s145, 128, 128, 8
        $region20: #{tpu_custom_call.1} parent=15 // pred_fallthru
          _
        // Predicated region
        $region21: #{tpu_custom_call.1} parent=15 // pred_check
          %p168 = pneg %p64
        $region22: #{tpu_custom_call.1} parent=15 // pred_check_branch
          %170 = sbr.rel (%p168) target = $region24
        $region23: #{tpu_custom_call.1} parent=15 // pred_region
          %s171 = sand.u32 %s18, 1
          %s172 = scalar_lea.sflag [#allocation6], %s171
          %s173 = sand.u32 %s54, 1
          %s174 = smul.addr %s173, 16
          %s175 = scalar_lea.vmem [#allocation5], %s174
          %s176 = smul.u32 2, %s18
          %s177 = ssub.s32 5, %s176
          %p178 = scmp.lt.s32.totalorder %s177, 2
          %s179 = scalar_select %p178, %s177, 2
          %s180 = smul.u32 128, %s179
          %s182 = ssub.s32 256, %s180
          %183 = vsyncadd %s172, %s182
          %p184 = scmp.ne.s32.totalorder 0, %s180
          %s185 = smul.addr %s176, 128
          %s186 = scalar_lea.hbm %s1, %s185
          %s187 = smul.u32 8, %s179
          %s188 = sshll.u32 %s175, 4
          %s189 = int_to_ptr.vmem [resolvable:$true] %s188
          %s190 = sshll.u32 %s187, 4
          %194 = dma.hbm_to_vmem [thread:$0]  (%p184), %s186, %s190, %s189, %s172, 128, 128, 8
        $region24: #{tpu_custom_call.1} parent=15 // pred_fallthru
          _
        // Predicated region
        $region25: #{tpu_custom_call.1} parent=15 // pred_check
          %p195 = pneg %p90
        $region26: #{tpu_custom_call.1} parent=15 // pred_check_branch
          %197 = sbr.rel (%p195) target = $region28
        $region27: #{tpu_custom_call.1} parent=15 // pred_region
          %s198 = sand.u32 %s18, 1
          %s199 = scalar_lea.sflag [#allocation6], %s198
          %s200 = sand.u32 %s80, 1
          %s201 = smul.addr %s200, 16
          %s202 = scalar_lea.vmem [#allocation7], %s201
          %s203 = smul.u32 2, %s18
          %s204 = ssub.s32 5, %s203
          %p205 = scmp.lt.s32.totalorder %s204, 2
          %s206 = scalar_select %p205, %s204, 2
          %s207 = smul.u32 128, %s206
          %s209 = ssub.s32 256, %s207
          %210 = vsyncadd %s199, %s209
          %p211 = scmp.ne.s32.totalorder 0, %s207
          %s212 = smul.addr %s203, 128
          %s213 = scalar_lea.hbm %s2, %s212
          %s214 = smul.u32 8, %s206
          %s215 = sshll.u32 %s202, 4
          %s216 = int_to_ptr.vmem [resolvable:$true] %s215
          %s217 = sshll.u32 %s214, 4
          %221 = dma.hbm_to_vmem [thread:$0]  (%p211), %s213, %s217, %s216, %s199, 128, 128, 8
        $region28: #{tpu_custom_call.1} parent=15 // pred_fallthru
          _
      $region16: #{tpu_custom_call.1} parent=5 // pred_fallthru
        _
      %p222 = scmp.le.s32.totalorder 1, %s18
      %p223 = scmp.lt.s32.totalorder %s18, 4
      %p224 = pnand %p222, %p223
      %p225 = pneg %p224
      // Predicated region
      $region29: #{tpu_custom_call.1} parent=5 // pred_check
        _
      $region30: #{tpu_custom_call.1} parent=5 // pred_check_branch
        %227 = sbr.rel (%p224) target = $region32
      $region31: #{tpu_custom_call.1} parent=5 // pred_region
        %s228 = ssub.s32 %s18, 1
        %s229 = sand.u32 %s31, 1
        %s230 = scalar_lea.sflag [#allocation3], %s229
        %s231 = sand.u32 %s31, 1
        %s232 = smul.addr %s231, 16
        %s233 = scalar_lea.vmem [#allocation2], %s232
        // Predicated region
        $region33: #{tpu_custom_call.1} parent=31 // pred_check
          %p234 = pneg %p44
        $region34: #{tpu_custom_call.1} parent=31 // pred_check_branch
          %236 = sbr.rel (%p234) target = $region36
        $region35: #{tpu_custom_call.1} parent=31 // pred_region
          %237 = dma.done %s230, 256
        $region36: #{tpu_custom_call.1} parent=31 // pred_fallthru
          _
        %s238 = sand.u32 %s23, 1
        %s239 = scalar_lea.sflag [#allocation6], %s238
        %s240 = sand.u32 %s57, 1
        %s241 = smul.addr %s240, 16
        %s242 = scalar_lea.vmem [#allocation5], %s241
        // Predicated region
        $region37: #{tpu_custom_call.1} parent=31 // pred_check
          %p243 = pneg %p70
        $region38: #{tpu_custom_call.1} parent=31 // pred_check_branch
          %245 = sbr.rel (%p243) target = $region40
        $region39: #{tpu_custom_call.1} parent=31 // pred_region
          %246 = dma.done %s239, 256
        $region40: #{tpu_custom_call.1} parent=31 // pred_fallthru
          _
        %s247 = sand.u32 %s23, 1
        %s248 = scalar_lea.sflag [#allocation6], %s247
        %s249 = sand.u32 %s83, 1
        %s250 = smul.addr %s249, 16
        %s251 = scalar_lea.vmem [#allocation7], %s250
        // Predicated region
        $region41: #{tpu_custom_call.1} parent=31 // pred_check
          %p252 = pneg %p96
        $region42: #{tpu_custom_call.1} parent=31 // pred_check_branch
          %254 = sbr.rel (%p252) target = $region44
        $region43: #{tpu_custom_call.1} parent=31 // pred_region
          %255 = dma.done %s248, 256
        $region44: #{tpu_custom_call.1} parent=31 // pred_fallthru
          _
        %s256 = sand.u32 %s31, 1
        %s257 = scalar_lea.sflag [#allocation3], %s256
        %s258 = sand.u32 %s31, 1
        %s259 = smul.addr %s258, 16
        %s260 = scalar_lea.vmem [#allocation2], %s259
        %p261 = pneg %p44
        %p262 = pneg %p41
        %s263 = sand.u32 %s23, 1
        %s264 = scalar_lea.sflag [#allocation6], %s263
        %s265 = sand.u32 %s57, 1
        %s266 = smul.addr %s265, 16
        %s267 = scalar_lea.vmem [#allocation5], %s266
        %p268 = pneg %p70
        %p269 = pneg %p67
        %s270 = sand.u32 %s23, 1
        %s271 = scalar_lea.sflag [#allocation6], %s270
        %s272 = sand.u32 %s83, 1
        %s273 = smul.addr %s272, 16
        %s274 = scalar_lea.vmem [#allocation7], %s273
        %p275 = pneg %p96
        %p276 = pneg %p93
        %p277 = pneg %p122
        %p278 = pneg %p119
        %s279 = sand.u32 %s109, 1
        %s280 = scalar_lea.sflag [#allocation4], %s279
        %s281 = sand.u32 %s109, 1
        %s282 = scalar_lea.vmem [#allocation8], %s281
        %s283 = smul.u32 2, %s23
        %s284 = ssub.s32 5, %s283
        %p285 = scmp.lt.s32.totalorder %s284, 2
        %s286 = scalar_select %p285, %s284, 2
        %s287 = smul.u32 128, %s286
        %s288 = smul.u32 2, %s23
        %s289 = ssub.s32 5, %s288
        %p290 = scmp.lt.s32.totalorder %s289, 2
        %s291 = scalar_select %p290, %s289, 2
        %s292 = smul.u32 128, %s291
        %s293 = smul.u32 2, %s23
        %s294 = ssub.s32 5, %s293
        %p295 = scmp.lt.s32.totalorder %s294, 2
        %s296 = scalar_select %p295, %s294, 2
        %s297 = smul.u32 128, %s296
        %v298 = vld [vmem:[%s233] sm:$0xff]
        %v299 = vld [vmem:[%s233 + $0x8] sm:$0xff]
        %v300 = vld [vmem:[%s242] sm:$0xff]
        %v301 = vld [vmem:[%s242 + $0x8] sm:$0xff]
        %v302 = vld [vmem:[%s251] sm:$0xff]
        %v303 = vld [vmem:[%s251 + $0x8] sm:$0xff]
        %v304 = vmul.f32 %v298, %v300
        %v305 = vmul.f32 %v299, %v301
        %306 = vadd.xlane.f32.xlu0 %v304
        %v307 = vpop.xlane.xlu0 %306
        %308 = vadd.xlane.f32.xlu0 %v305
        %v309 = vpop.xlane.xlu0 %308
        %v310 = vmul.f32 %v298, %v302
        %v311 = vmul.f32 %v299, %v303
        %312 = vadd.xlane.f32.xlu0 %v310
        %v313 = vpop.xlane.xlu0 %312
        %314 = vadd.xlane.f32.xlu0 %v311
        %v315 = vpop.xlane.xlu0 %314
        %v316 = vmul.f32 %v298, %v298
        %v317 = vmul.f32 %v299, %v299
        %318 = vadd.xlane.f32.xlu0 %v316
        %v319 = vpop.xlane.xlu0 %318
        %320 = vadd.xlane.f32.xlu0 %v317
        %v321 = vpop.xlane.xlu0 %320
        %v322 = vmul.f32 %v300, %v300
        %v323 = vmul.f32 %v301, %v301
        %324 = vadd.xlane.f32.xlu0 %v322
        %v325 = vpop.xlane.xlu0 %324
        %326 = vadd.xlane.f32.xlu0 %v323
        %v327 = vpop.xlane.xlu0 %326
        %v328 = vmul.f32 %v302, %v302
        %v329 = vmul.f32 %v303, %v303
        %330 = vadd.xlane.f32.xlu0 %v328
        %v331 = vpop.xlane.xlu0 %330
        %332 = vadd.xlane.f32.xlu0 %v329
        %v333 = vpop.xlane.xlu0 %332
        %v334 = vrsqrt.pop %v319
        %v335 = vmul.f32 %v319, %v334
        %vm336 = vcmp.eq.f32.partialorder %v319, inf
        %v337 = vsel %vm336, %v319, %v335
        %vm338 = vcmp.eq.f32.partialorder %v319, 0.0
        %v339 = vand.u32 %v319, 2147483648
        %v340 = vsel %vm338, %v339, %v337
        %v341 = vrsqrt.pop %v321
        %v342 = vmul.f32 %v321, %v341
        %vm343 = vcmp.eq.f32.partialorder %v321, inf
        %v344 = vsel %vm343, %v321, %v342
        %vm345 = vcmp.eq.f32.partialorder %v321, 0.0
        %v346 = vand.u32 %v321, 2147483648
        %v347 = vsel %vm345, %v346, %v344
        %v348 = vrsqrt.pop %v325
        %v349 = vmul.f32 %v325, %v348
        %vm350 = vcmp.eq.f32.partialorder %v325, inf
        %v351 = vsel %vm350, %v325, %v349
        %vm352 = vcmp.eq.f32.partialorder %v325, 0.0
        %v353 = vand.u32 %v325, 2147483648
        %v354 = vsel %vm352, %v353, %v351
        %v355 = vrsqrt.pop %v327
        %v356 = vmul.f32 %v327, %v355
        %vm357 = vcmp.eq.f32.partialorder %v327, inf
        %v358 = vsel %vm357, %v327, %v356
        %vm359 = vcmp.eq.f32.partialorder %v327, 0.0
        %v360 = vand.u32 %v327, 2147483648
        %v361 = vsel %vm359, %v360, %v358
        %v362 = vmul.f32 %v340, %v354
        %v363 = vmul.f32 %v347, %v361
        %v364 = vmax.f32 %v362, 1e-08
        %v365 = vmax.f32 %v363, 1e-08
        %v366 = vrcp.pop %v364
        %v367 = vmul.f32 %v307, %v366
        %v368 = vrcp.pop %v365
        %v369 = vmul.f32 %v309, %v368
        %v370 = vrsqrt.pop %v331
        %v371 = vmul.f32 %v331, %v370
        %vm372 = vcmp.eq.f32.partialorder %v331, inf
        %v373 = vsel %vm372, %v331, %v371
        %vm374 = vcmp.eq.f32.partialorder %v331, 0.0
        %v375 = vand.u32 %v331, 2147483648
        %v376 = vsel %vm374, %v375, %v373
        %v377 = vrsqrt.pop %v333
        %v378 = vmul.f32 %v333, %v377
        %vm379 = vcmp.eq.f32.partialorder %v333, inf
        %v380 = vsel %vm379, %v333, %v378
        %vm381 = vcmp.eq.f32.partialorder %v333, 0.0
        %v382 = vand.u32 %v333, 2147483648
        %v383 = vsel %vm381, %v382, %v380
        %v384 = vmul.f32 %v340, %v376
        %v385 = vmul.f32 %v347, %v383
        %v386 = vmax.f32 %v384, 1e-08
        %v387 = vmax.f32 %v385, 1e-08
        %v388 = vrcp.pop %v386
        %v389 = vmul.f32 %v313, %v388
        %v390 = vrcp.pop %v387
        %v391 = vmul.f32 %v315, %v390
        %v392 = vsub.f32 %v389, %v367
        %v393 = vsub.f32 %v391, %v369
        %v394 = vmul.f32 %v392, 20.0
        %v395 = vmul.f32 %v393, 20.0
        %v396 = vmax.f32 %v394, 0.0
        %v397 = vmax.f32 %v395, 0.0
        %v398 = vand.u32 2147483647, %v394
        %v399 = vand.u32 2147483647, %v395
        %v400 = vsub.f32 0.0, %v398
        %v401 = vsub.f32 0.0, %v399
        %v402 = vmul.f32 %v400, 1.442695
        %v403 = vpow.pop %v402
        %v404 = vmul.f32 %v401, 1.442695
        %v405 = vpow.pop %v404
        %v406 = vadd.f32 %v403, 1.0
        %v407 = vlog2.pop %v406
        %v408 = vmul.f32 %v407, 0.6931472
        %v409 = vmul.f32 -0.5, %v403
        %v410 = vadd.f32 %v409, 1.0
        %v411 = vmul.f32 %v410, %v403
        %v412 = vand.u32 2147483647, %v403
        %vm413 = vcmp.lt.f32.partialorder %v412, 0.0004427343
        %v414 = vsel %vm413, %v411, %v408
        %v415 = vadd.f32 %v405, 1.0
        %v416 = vlog2.pop %v415
        %v417 = vmul.f32 %v416, 0.6931472
        %v418 = vmul.f32 -0.5, %v405
        %v419 = vadd.f32 %v418, 1.0
        %v420 = vmul.f32 %v419, %v405
        %v421 = vand.u32 2147483647, %v405
        %vm422 = vcmp.lt.f32.partialorder %v421, 0.0004427343
        %v423 = vsel %vm422, %v420, %v417
        %v424 = vadd.f32 %v396, %v414
        %v425 = vadd.f32 %v397, %v423
        %s426 = smul.u32 %s23, 16
        %v427 = vlaneseq
        %v428 = vshrl.u32 %v427, 7
        %v429 = vadd.s32 %v428, 8
        %v430 = vstv %s426
        %v431 = vadd.s32 %v430, %v428
        %v432 = vadd.s32 %v430, %v429
        %vm433 = vcmp.lt.s32.totalorder %v431, 40
        %vm434 = vcmp.lt.s32.totalorder %v432, 40
        %v435 = vsel %vm433, %v424, 0.0
        %v436 = vsel %vm434, %v425, 0.0
        %vm437 = vcmask 7168
        %v438 = vsel %vm437, %v435, 0.0
        %v439 = vsel %vm437, %v436, 0.0
        %v440 = vadd.f32 %v438, %v439
        %441 = vadd.xlane.f32.xlu0 %v440
        %v442 = vpop.xlane.xlu0 %441
        %v443 = vrot.slane %v442, 4
        %v444 = vadd.f32 %v442, %v443
        %v445 = vrot.slane %v444, 2
        %v446 = vadd.f32 %v444, %v445
        %v447 = vrot.slane %v446, 1
        %v448 = vadd.f32 %v446, %v447
        %s449 = vtos %v448
        %v450 = vstv %s449
        %451 = vst [vmem:[%s282] sm:$0x1] %v450
        %s452 = sand.u32 %s109, 1
        %s453 = scalar_lea.sflag [#allocation4], %s452
        %s454 = sand.u32 %s109, 1
        %s455 = scalar_lea.vmem [#allocation8], %s454
        // Predicated region
        $region45: #{tpu_custom_call.1} parent=31 // pred_check
          %p456 = pneg %p119
        $region46: #{tpu_custom_call.1} parent=31 // pred_check_branch
          %458 = sbr.rel (%p456) target = $region48
        $region47: #{tpu_custom_call.1} parent=31 // pred_region
          %s460 = ssub.s32 16, 16
          %461 = vsyncadd %s453, %s460
          %s462 = smul.addr %s23, 16
          %s463 = scalar_lea.hbm %s3, %s462
          %s465 = sshll.u32 %s455, 4
          %s466 = int_to_ptr.vmem [resolvable:$true] %s465
          %468 = dma.vmem_to_hbm [thread:$0]  %s466, 16, %s463, %s453
        $region48: #{tpu_custom_call.1} parent=31 // pred_fallthru
          _
      $region32: #{tpu_custom_call.1} parent=5 // pred_fallthru
        _
      %p469 = scmp.le.s32.totalorder 2, %s18
      // Predicated region
      $region49: #{tpu_custom_call.1} parent=5 // pred_check
        %p470 = pneg %p469
      $region50: #{tpu_custom_call.1} parent=5 // pred_check_branch
        %472 = sbr.rel (%p470) target = $region52
      $region51: #{tpu_custom_call.1} parent=5 // pred_region
        %s473 = ssub.s32 %s18, 2
        // Predicated region
        $region53: #{tpu_custom_call.1} parent=51 // pred_check
          %p474 = pneg %p125
        $region54: #{tpu_custom_call.1} parent=51 // pred_check_branch
          %476 = sbr.rel (%p474) target = $region56
        $region55: #{tpu_custom_call.1} parent=51 // pred_region
          %s477 = sand.u32 %s110, 1
          %s478 = scalar_lea.sflag [#allocation4], %s477
          %s479 = sand.u32 %s110, 1
          %s480 = scalar_lea.vmem [#allocation8], %s479
          %481 = dma.done %s478, 16
        $region56: #{tpu_custom_call.1} parent=51 // pred_fallthru
          _
      $region52: #{tpu_custom_call.1} parent=5 // pred_fallthru
        _
    $region6: #{tpu_custom_call.1} parent=1 // loop_footer
      %s22 = sadd.s32 1, %s18
    $region7: #{tpu_custom_call.1} parent=1 // loop_footer_branch
      %17 = sbr.rel target = $region3
    $region8: #{tpu_custom_call.1} parent=1 // loop_exit
      _
    %482 = vsyncpa [#allocation3], 1
    %s483 = scalar_lea.sflag [#allocation3], 1
    %484 = vsyncpa %s483, 1
    %485 = vsyncpa [#allocation6], 1
    %s486 = scalar_lea.sflag [#allocation6], 1
    %487 = vsyncpa %s486, 1
    %488 = vsyncpa [#allocation4], 1
    %s489 = scalar_lea.sflag [#allocation4], 1
    %490 = vsyncpa %s489, 1

</llo_original>
